<compile_context>
chip_gen: v5e
topology: v5e:2x2
jax: 0.10.0
libtpu: 0.0.40
codegen_flags: <defaults>
</compile_context>

<pallas_src>
import functools

import jax
import jax.numpy as jnp
from jax.experimental import pallas as pl
from jax.experimental.pallas import tpu as pltpu


def conv_block_kernel(x_ref, w2f_ref, b2c_ref, w3t_ref, b3c_ref, o_ref, *,
                      c_in, pool_size):
    """One (batch element, pooled-output L tile) per grid step.

    x_ref  : (pool_size, K, out_w) f32  stacked taps; channel rows ordered as
             [x(t) (c_in) | x(t-d) (c_in) | x(t+d) (c_in) | prev-tap-valid |
              next-tap-valid | zero pad].  Lane m / phase p corresponds to the
             original position (tile_base + m) * pool_size + p.
    w2f_ref: (F, K)      bf16  folded conv1+conv2 weight (+ b1 boundary cols)
    b2c_ref: (F, 1)      f32   b2 + center-tap contribution of b1
    w3t_ref: (C_out, F)  bf16  conv3 weight, transposed
    b3c_ref: (C_out, 1)  f32
    o_ref  : (C_out, out_w) f32  NCL output tile (lanes = pooled positions)
    """
    w2f = w2f_ref[...]
    w3t = w3t_ref[...]
    b2c = b2c_ref[...]
    b3c = b3c_ref[...]

    best = None
    for p in range(pool_size):                       # static, small pool-phase loop
        taps = x_ref[p]                                              # (K, out_w) f32
        h2 = jnp.dot(w2f, taps.astype(jnp.bfloat16),
                     preferred_element_type=jnp.float32) + b2c       # (F, out_w)
        h3 = jnp.dot(w3t, h2.astype(jnp.bfloat16),
                     preferred_element_type=jnp.float32)             # (C_out, out_w)
        y = h3 + b3c + taps[0:c_in, :]                               # residual, f32
        best = y if best is None else jnp.maximum(best, y)
    o_ref[...] = jnp.maximum(best, 0.0)                              # pool then ReLU


def conv_block(x_ncl, params, *, dilation, pool_size, max_out_w=4096):
    """Forward pass matching the PyTorch ConvBlock.  Input/output are NCL."""
    w1, b1, w2, b2, w3, b3 = params        # (C,F), (1,F), (3,F,F), (1,F), (F,C), (1,C)
    N, C_in, L = x_ncl.shape
    F = w1.shape[1]
    C_out = w3.shape[1]
    d = int(dilation)
    ps = int(pool_size)
    assert C_in == C_out, "residual add requires in_channels == out_channels"
    assert ps >= 1 and L >= ps
    assert max_out_w % 128 == 0

    L_out = L // ps                                  # floor-mode pooling
    out_w = L_out if L_out <= max_out_w else max_out_w
    num_tiles = pl.cdiv(L_out, out_w)
    Lp = num_tiles * out_w                           # padded pooled length (input only)
    Lfull = Lp * ps

    # ---- fold conv1 into the dilated conv (compose in f32, ship bf16) --------
    k_real = 3 * C_in + 2
    KP = ((k_real + 15) // 16) * 16                  # bf16-friendly sublane count
    w1f = w1.astype(jnp.float32)
    w2f32 = w2.astype(jnp.float32)
    b1f = b1.astype(jnp.float32)
    A_prev = w1f @ w2f32[0]                          # (C_in, F): tap at t-d
    A_cur = w1f @ w2f32[1]                           # tap at t
    A_next = w1f @ w2f32[2]                          # tap at t+d
    corr_prev = (b1f @ w2f32[0]).reshape(F, 1)       # b1 term, gated by prev-tap valid
    corr_next = (b1f @ w2f32[2]).reshape(F, 1)       # b1 term, gated by next-tap valid
    w2f = jnp.concatenate(
        [A_cur.T, A_prev.T, A_next.T, corr_prev, corr_next,
         jnp.zeros((F, KP - k_real), jnp.float32)], axis=1).astype(jnp.bfloat16)
    b2c = (b2.astype(jnp.float32) + b1f @ w2f32[1]).reshape(F, 1)
    w3t = w3.T.astype(jnp.bfloat16)                  # (C_out, F)
    b3c = b3.astype(jnp.float32).reshape(C_out, 1)

    # ---- stack shifted taps + validity rows; factor positions as (L_out, ps) -
    xf = x_ncl.astype(jnp.float32)
    x_prev = jnp.pad(xf, ((0, 0), (0, 0), (d, 0)))[:, :, :L]   # x[t-d] ('same' zeros)
    x_next = jnp.pad(xf, ((0, 0), (0, 0), (0, d)))[:, :, d:]   # x[t+d]
    pos = jnp.arange(L)
    vp = jnp.broadcast_to((pos >= d).astype(jnp.float32), (N, 1, L))
    vn = jnp.broadcast_to((pos < L - d).astype(jnp.float32), (N, 1, L))
    pad_rows = jnp.zeros((N, KP - k_real, L), jnp.float32)
    rows = jnp.concatenate([xf, x_prev, x_next, vp, vn, pad_rows], axis=1)  # (N,KP,L)
    if Lfull > L:
        rows = jnp.pad(rows, ((0, 0), (0, 0), (0, Lfull - L)))  # zero tail tile
    elif Lfull < L:
        rows = rows[:, :, :Lfull]                               # dropped by floor pool
    x_taps = rows.reshape(N, KP, Lp, ps).transpose(0, 3, 1, 2)  # (N, ps, KP, Lp)

    kernel = functools.partial(conv_block_kernel, c_in=C_in, pool_size=ps)
    return pl.pallas_call(
        kernel,
        out_shape=jax.ShapeDtypeStruct((N, C_out, L_out), jnp.float32),
        grid=(N, num_tiles),
        in_specs=[
            # stacked taps: plain blocked tile, auto double-buffered by Pallas.
            pl.BlockSpec((None, ps, KP, out_w), lambda n, li: (n, 0, 0, li)),
            # weights/biases: constant index_maps -> resident across grid steps.
            pl.BlockSpec((F, KP), lambda n, li: (0, 0)),
            pl.BlockSpec((F, 1), lambda n, li: (0, 0)),
            pl.BlockSpec((C_out, F), lambda n, li: (0, 0)),
            pl.BlockSpec((C_out, 1), lambda n, li: (0, 0)),
        ],
        out_specs=pl.BlockSpec((None, C_out, out_w), lambda n, li: (n, 0, li)),
        compiler_params=pltpu.CompilerParams(
            dimension_semantics=("parallel", "parallel"),
            vmem_limit_bytes=32 * 1024 * 1024,   # footprint is a few MiB per step
        ),
    )(x_taps, w2f, b2c, w3t, b3c)


def reference_conv_block(x_ncl, params, *, dilation, pool_size):
    """Pure-f32 reference with the exact PyTorch ConvBlock semantics."""
    w1, b1, w2, b2, w3, b3 = params
    N, C, L = x_ncl.shape
    d = int(dilation)
    F = w1.shape[1]
    xf = x_ncl.astype(jnp.float32)
    h1 = jnp.einsum("ncl,cf->nfl", xf, w1.astype(jnp.float32)) + b1.reshape(1, F, 1)
    h1p = jnp.pad(h1, ((0, 0), (0, 0), (d, d)))                   # 'same' zero padding
    h2 = (jnp.einsum("nfl,fg->ngl", h1p[:, :, 0:L], w2[0].astype(jnp.float32))
          + jnp.einsum("nfl,fg->ngl", h1p[:, :, d:d + L], w2[1].astype(jnp.float32))
          + jnp.einsum("nfl,fg->ngl", h1p[:, :, 2 * d:2 * d + L], w2[2].astype(jnp.float32))
          + b2.reshape(1, F, 1))
    h3 = jnp.einsum("nfl,fc->ncl", h2, w3.astype(jnp.float32)) + b3.reshape(1, -1, 1)
    y = xf + h3
    L_out = L // pool_size
    y = y[:, :, :L_out * pool_size].reshape(N, C, L_out, pool_size).max(axis=-1)
    return jnp.maximum(y, 0.0)


def init_params(key, in_channels, out_channels, feature_dim):
    """Deterministic synthetic parameters in matmul (channels-last) layout.
    w2[k] corresponds to torch conv2.weight[:, :, k].T (tap k -> offset (k-1)*d)."""
    k1, k2, k3, k4, k5, k6 = jax.random.split(key, 6)
    w1 = 0.1 * jax.random.normal(k1, (in_channels, feature_dim), jnp.float32)
    b1 = 0.1 * jax.random.normal(k2, (1, feature_dim), jnp.float32)
    w2 = 0.1 * jax.random.normal(k3, (3, feature_dim, feature_dim), jnp.float32)
    b2 = 0.1 * jax.random.normal(k4, (1, feature_dim), jnp.float32)
    w3 = 0.1 * jax.random.normal(k5, (feature_dim, out_channels), jnp.float32)
    b3 = 0.1 * jax.random.normal(k6, (1, out_channels), jnp.float32)
    return (w1, b1, w2, b2, w3, b3)


if __name__ == "__main__":
    # Small shapes implied by the module (Conv1d inputs are (N, C, L));
    # feature_dim=128 is the module's default and is MXU/lane friendly.
    N, C, L = 2, 4, 16          # in_channels == out_channels == 4 (residual add)
    feature_dim = 128
    pool_size = 2
    dilation = 2

    key = jax.random.PRNGKey(0)
    kx, kp = jax.random.split(key)
    x = jax.random.normal(kx, (N, C, L), jnp.float32)
    params = init_params(kp, C, C, feature_dim)

    out = conv_block(x, params, dilation=dilation, pool_size=pool_size)
    out = jax.block_until_ready(out)

    ref = reference_conv_block(x, params, dilation=dilation, pool_size=pool_size)
    assert out.shape == (N, C, L // pool_size), out.shape
    assert jnp.allclose(out, ref, atol=3e-2, rtol=3e-2), (
        float(jnp.max(jnp.abs(out - ref))))

    # Extra robustness check: multi-tile grid with a partial tail tile.
    x2 = jax.random.normal(jax.random.PRNGKey(1), (2, C, 600), jnp.float32)
    out2 = jax.block_until_ready(
        conv_block(x2, params, dilation=3, pool_size=2, max_out_w=128))
    ref2 = reference_conv_block(x2, params, dilation=3, pool_size=2)
    assert out2.shape == ref2.shape, (out2.shape, ref2.shape)
    assert jnp.allclose(out2, ref2, atol=3e-2, rtol=3e-2), (
        float(jnp.max(jnp.abs(out2 - ref2))))

    print("KERNEL_OK")
</pallas_src>

<mosaic_0001>
module attributes {stable_mosaic.version = 11 : i64} {
  func.func @conv_block_kernel(%arg0: i32, %arg1: i32, %arg2: memref<1x2x16x8xf32, #tpu.memory_space<vmem>>, %arg3: memref<128x16xbf16, #tpu.memory_space<vmem>>, %arg4: memref<128x1xf32, #tpu.memory_space<vmem>>, %arg5: memref<4x128xbf16, #tpu.memory_space<vmem>>, %arg6: memref<4x1xf32, #tpu.memory_space<vmem>>, %arg7: memref<1x4x8xf32, #tpu.memory_space<vmem>>) attributes {dimension_semantics = [#tpu.dimension_semantics<parallel>, #tpu.dimension_semantics<parallel>], iteration_bounds = array<i64: 2, 1>, scalar_prefetch = 0 : i64, scratch_operands = 0 : i64, tpu.core_type = #tpu.core_type<tc>, window_params = [{transform_indices = @transform_0, window_bounds = array<i64: 1, 2, 16, 8>}, {pipeline_mode = #tpu.pipeline_mode<synchronous>, transform_indices = @transform_1, window_bounds = array<i64: 128, 16>}, {pipeline_mode = #tpu.pipeline_mode<synchronous>, transform_indices = @transform_2, window_bounds = array<i64: 128, 1>}, {pipeline_mode = #tpu.pipeline_mode<synchronous>, transform_indices = @transform_3, window_bounds = array<i64: 4, 128>}, {pipeline_mode = #tpu.pipeline_mode<synchronous>, transform_indices = @transform_4, window_bounds = array<i64: 4, 1>}, {transform_indices = @transform_5, window_bounds = array<i64: 1, 4, 8>}]} {
    %c0 = arith.constant 0 : index
    %c0_0 = arith.constant 0 : index
    %0 = vector.load %arg3[%c0, %c0_0] : memref<128x16xbf16, #tpu.memory_space<vmem>>, vector<128x16xbf16>
    %c0_1 = arith.constant 0 : index
    %c0_2 = arith.constant 0 : index
    %1 = vector.load %arg5[%c0_1, %c0_2] : memref<4x128xbf16, #tpu.memory_space<vmem>>, vector<4x128xbf16>
    %c0_3 = arith.constant 0 : index
    %c0_4 = arith.constant 0 : index
    %2 = vector.load %arg4[%c0_3, %c0_4] : memref<128x1xf32, #tpu.memory_space<vmem>>, vector<128x1xf32>
    %c0_5 = arith.constant 0 : index
    %c0_6 = arith.constant 0 : index
    %3 = vector.load %arg6[%c0_5, %c0_6] : memref<4x1xf32, #tpu.memory_space<vmem>>, vector<4x1xf32>
    %c0_7 = arith.constant 0 : index
    %c0_8 = arith.constant 0 : index
    %c0_9 = arith.constant 0 : index
    %c0_10 = arith.constant 0 : index
    %4 = vector.load %arg2[%c0_7, %c0_8, %c0_9, %c0_10] : memref<1x2x16x8xf32, #tpu.memory_space<vmem>>, vector<1x1x16x8xf32>
    %5 = vector.shape_cast %4 : vector<1x1x16x8xf32> to vector<16x8xf32>
    %6 = arith.truncf %5 : vector<16x8xf32> to vector<16x8xbf16>
    %cst = arith.constant dense<0.000000e+00> : vector<128x8xf32>
    %7 = tpu.matmul %0, %6, %cst {dimension_numbers = #tpu.dot_dimension_numbers<[1], [0], [0], [1], [0, 0, 1, 1], [], []>} : vector<128x16xbf16>, vector<16x8xbf16>, vector<128x8xf32> -> vector<128x8xf32>
    %8 = vector.broadcast %2 : vector<128x1xf32> to vector<128x8xf32>
    %9 = arith.addf %7, %8 : vector<128x8xf32>
    %10 = arith.truncf %9 : vector<128x8xf32> to vector<128x8xbf16>
    %cst_11 = arith.constant dense<0.000000e+00> : vector<4x8xf32>
    %11 = tpu.matmul %1, %10, %cst_11 {dimension_numbers = #tpu.dot_dimension_numbers<[1], [0], [0], [1], [0, 0, 1, 1], [], []>} : vector<4x128xbf16>, vector<128x8xbf16>, vector<4x8xf32> -> vector<4x8xf32>
    %12 = vector.broadcast %3 : vector<4x1xf32> to vector<4x8xf32>
    %13 = arith.addf %11, %12 : vector<4x8xf32>
    %14 = vector.extract_strided_slice %5 {offsets = [0, 0], sizes = [4, 8], strides = [1, 1]} : vector<16x8xf32> to vector<4x8xf32>
    %15 = arith.addf %13, %14 : vector<4x8xf32>
    %c0_12 = arith.constant 0 : index
    %c1 = arith.constant 1 : index
    %c0_13 = arith.constant 0 : index
    %c0_14 = arith.constant 0 : index
    %16 = vector.load %arg2[%c0_12, %c1, %c0_13, %c0_14] : memref<1x2x16x8xf32, #tpu.memory_space<vmem>>, vector<1x1x16x8xf32>
    %17 = vector.shape_cast %16 : vector<1x1x16x8xf32> to vector<16x8xf32>
    %18 = arith.truncf %17 : vector<16x8xf32> to vector<16x8xbf16>
    %cst_15 = arith.constant dense<0.000000e+00> : vector<128x8xf32>
    %19 = tpu.matmul %0, %18, %cst_15 {dimension_numbers = #tpu.dot_dimension_numbers<[1], [0], [0], [1], [0, 0, 1, 1], [], []>} : vector<128x16xbf16>, vector<16x8xbf16>, vector<128x8xf32> -> vector<128x8xf32>
    %20 = vector.broadcast %2 : vector<128x1xf32> to vector<128x8xf32>
    %21 = arith.addf %19, %20 : vector<128x8xf32>
    %22 = arith.truncf %21 : vector<128x8xf32> to vector<128x8xbf16>
    %cst_16 = arith.constant dense<0.000000e+00> : vector<4x8xf32>
    %23 = tpu.matmul %1, %22, %cst_16 {dimension_numbers = #tpu.dot_dimension_numbers<[1], [0], [0], [1], [0, 0, 1, 1], [], []>} : vector<4x128xbf16>, vector<128x8xbf16>, vector<4x8xf32> -> vector<4x8xf32>
    %24 = vector.broadcast %3 : vector<4x1xf32> to vector<4x8xf32>
    %25 = arith.addf %23, %24 : vector<4x8xf32>
    %26 = vector.extract_strided_slice %17 {offsets = [0, 0], sizes = [4, 8], strides = [1, 1]} : vector<16x8xf32> to vector<4x8xf32>
    %27 = arith.addf %25, %26 : vector<4x8xf32>
    %28 = arith.maximumf %15, %27 : vector<4x8xf32>
    %cst_17 = arith.constant 0.000000e+00 : f32
    %29 = vector.broadcast %cst_17 : f32 to vector<4x8xf32>
    %30 = arith.maximumf %28, %29 : vector<4x8xf32>
    %c0_18 = arith.constant 0 : index
    %c0_19 = arith.constant 0 : index
    %c0_20 = arith.constant 0 : index
    %31 = vector.load %arg7[%c0_18, %c0_19, %c0_20] : memref<1x4x8xf32, #tpu.memory_space<vmem>>, vector<1x4x8xf32>
    %32 = vector.shape_cast %31 : vector<1x4x8xf32> to vector<4x8xf32>
    %33 = vector.shape_cast %30 : vector<4x8xf32> to vector<1x4x8xf32>
    tpu.vector_store %arg7[%c0_18, %c0_19, %c0_20], %33 {strides = array<i32>} : memref<1x4x8xf32, #tpu.memory_space<vmem>>, vector<1x4x8xf32>,
    return
  }
  func.func @transform_0(%arg0: i32, %arg1: i32) -> (i32, i32, i32, i32) {
    %c0_i32 = arith.constant 0 : i32
    %c0_i32_0 = arith.constant 0 : i32
    %c0_i32_1 = arith.constant 0 : i32
    return %arg0, %c0_i32, %c0_i32_0, %arg1 : i32, i32, i32, i32
  }
  func.func @transform_1(%arg0: i32, %arg1: i32) -> (i32, i32) {
    %c0_i32 = arith.constant 0 : i32
    %c0_i32_0 = arith.constant 0 : i32
    %c0_i32_1 = arith.constant 0 : i32
    return %c0_i32, %c0_i32_0 : i32, i32
  }
  func.func @transform_2(%arg0: i32, %arg1: i32) -> (i32, i32) {
    %c0_i32 = arith.constant 0 : i32
    %c0_i32_0 = arith.constant 0 : i32
    %c0_i32_1 = arith.constant 0 : i32
    return %c0_i32, %c0_i32_0 : i32, i32
  }
  func.func @transform_3(%arg0: i32, %arg1: i32) -> (i32, i32) {
    %c0_i32 = arith.constant 0 : i32
    %c0_i32_0 = arith.constant 0 : i32
    %c0_i32_1 = arith.constant 0 : i32
    return %c0_i32, %c0_i32_0 : i32, i32
  }
  func.func @transform_4(%arg0: i32, %arg1: i32) -> (i32, i32) {
    %c0_i32 = arith.constant 0 : i32
    %c0_i32_0 = arith.constant 0 : i32
    %c0_i32_1 = arith.constant 0 : i32
    return %c0_i32, %c0_i32_0 : i32, i32
  }
  func.func @transform_5(%arg0: i32, %arg1: i32) -> (i32, i32, i32) {
    %c0_i32 = arith.constant 0 : i32
    %c0_i32_0 = arith.constant 0 : i32
    return %arg0, %c0_i32, %arg1 : i32, i32, i32
  }
}

</mosaic_0001>

<llo_original>
// kernel: tpu_custom_call.1
$region0: #{tpu_custom_call.1}
  #allocation0 [shape = 'u32[]', space=smem, size = 0x4, offset = 0x4, fixed_abs, tag = 'smem constant byte address 0x4 - core index']
  #allocation1 [shape = 'u32[72,128]{1,0:T(1,128)}', space=vmem, size = 0x9000, scoped, tag = 'internal scratch']
  %s0 = inlined_call_operand.vmem [shape: f32[2,2,16,8], index: 0, kind: input, shape index: {}]
  %s1 = inlined_call_operand.vmem [shape: bf16[128,16], index: 1, kind: input, shape index: {}]
  %s2 = inlined_call_operand.vmem [shape: f32[128,1], index: 2, kind: input, shape index: {}]
  %s3 = inlined_call_operand.vmem [shape: bf16[4,128], index: 3, kind: input, shape index: {}]
  %s4 = inlined_call_operand.vmem [shape: f32[4,1], index: 4, kind: input, shape index: {}]
  %s5 = inlined_call_operand.hbm [shape: f32[2,4,8], index: 5, kind: output, shape index: {}]
  %s6 = sld [smem:[#allocation0]]
  $region53: #{tpu_custom_call.1} parent=0
    _
  %s8 = ssub.s32 1, %s6
  %s9 = scalar_select 0, %s8, %s6
  $region1: #{tpu_custom_call.1} parent=0
    #allocation2 [shape = 'u8[4096]{0}', space=vmem, size = 0x1000, scoped, tag = 'output window, operand 0']
    #allocation3 [shape = 's32[2]{0}', space=sflag, size = 0x8, scoped, tag = 'scoped memory for tpu_custom_call.1']
    %10 = vsyncpa [#allocation3], 0
    %s11 = scalar_lea.sflag [#allocation3], 1
    %12 = vsyncpa %s11, 0
    loop: start=0, step=1, limit=4
    $region2: #{tpu_custom_call.1} parent=1 // loop_pre_header
      _
    $region3: #{tpu_custom_call.1} parent=1 // loop_header
      %s14 = sphi 0, %s18
      %p15 = scmp.ge.s32.totalorder %s14, 4
      %s21 = sphi 0, %s33
      %s22 = sphi 0, %s29
      %s23 = sphi 0, %s21
      %s24 = sphi 0, %s22
      %s25 = sphi 0, %s23
      %s26 = sphi 0, %s24
      %s38 = sphi 0, %s40
      %s41 = sphi 0, %s38
      %s42 = sphi 0, %s41
      %s58 = sphi 0, %s42
      %s62 = sphi 0, %s62
      %s64 = sphi 0, %s62
      %s65 = sphi 0, %s64
      %s79 = sphi 0, %s65
      %s83 = sphi 0, %s83
      %s85 = sphi 0, %s83
      %s86 = sphi 0, %s85
      %s100 = sphi 0, %s86
      %s104 = sphi 0, %s104
      %s106 = sphi 0, %s104
      %s107 = sphi 0, %s106
      %s121 = sphi 0, %s107
      %s125 = sphi 0, %s125
      %s127 = sphi 0, %s125
      %s128 = sphi 0, %s127
      %s142 = sphi 0, %s128
      %s150 = sphi 0, %s152
      %s153 = sphi 0, %s150
      %s154 = sphi 0, %s153
      %s170 = sphi 0, %s154
    $region4: #{tpu_custom_call.1} parent=1 // loop_header_branch
      %17 = sbr.rel (%p15) target = $region8
    $region5: #{tpu_custom_call.1} parent=1 // loop_body
      %s19 = ssub.s32 %s14, 1
      %s20 = ssub.s32 %s14, 2
      %s27 = sadd.s32 1, %s22
      %p28 = scmp.ge.s32.totalorder %s27, 1
      %s29 = scalar_select %p28, 0, %s27
      %s30 = sadd.s32 1, %s21
      %s31 = scalar_select %p28, %s30, %s21
      %p32 = scmp.ge.s32.totalorder %s31, 2
      %s33 = scalar_select %p32, 0, %s31
      %s34 = ssub.s32 %s21, %s33
      %s35 = ssub.s32 %s22, %s29
      %s36 = sor.u32 %s34, %s35
      %p37 = scmp.eq.s32.totalorder %s36, 0
      %s39 = sadd.s32 %s38, 1
      %s40 = scalar_select %p37, %s38, %s39
      %p43 = pneg %p37
      %p44 = scmp.eq.s32.totalorder %s14, 1
      %p45 = por %p43, %p44
      %p46 = scmp.ne.s32.totalorder %s38, %s41
      %p47 = scmp.eq.s32.totalorder %s14, 0
      %p48 = por %p46, %p47
      %p49 = scmp.ne.s32.totalorder %s38, %s41
      %p50 = scmp.eq.s32.totalorder %s19, 1
      %p51 = por %p49, %p50
      %p52 = scmp.ne.s32.totalorder %s41, %s42
      %p53 = scmp.eq.s32.totalorder %s19, 0
      %p54 = por %p52, %p53
      %p55 = scmp.ne.s32.totalorder %s41, %s42
      %p56 = scmp.eq.s32.totalorder %s20, 1
      %p57 = por %p55, %p56
      %p59 = scmp.ne.s32.totalorder %s42, %s58
      %p60 = scmp.eq.s32.totalorder %s20, 0
      %p61 = por %p59, %p60
      %s63 = sadd.s32 %s62, 1
      %p66 = scmp.eq.s32.totalorder %s14, 1
      %p67 = scmp.ne.s32.totalorder %s62, %s64
      %p68 = scmp.eq.s32.totalorder %s14, 0
      %p69 = por %p67, %p68
      %p70 = scmp.ne.s32.totalorder %s62, %s64
      %p71 = scmp.eq.s32.totalorder %s19, 1
      %p72 = por %p70, %p71
      %p73 = scmp.ne.s32.totalorder %s64, %s65
      %p74 = scmp.eq.s32.totalorder %s19, 0
      %p75 = por %p73, %p74
      %p76 = scmp.ne.s32.totalorder %s64, %s65
      %p77 = scmp.eq.s32.totalorder %s20, 1
      %p78 = por %p76, %p77
      %p80 = scmp.ne.s32.totalorder %s65, %s79
      %p81 = scmp.eq.s32.totalorder %s20, 0
      %p82 = por %p80, %p81
      %s84 = sadd.s32 %s83, 1
      %p87 = scmp.eq.s32.totalorder %s14, 1
      %p88 = scmp.ne.s32.totalorder %s83, %s85
      %p89 = scmp.eq.s32.totalorder %s14, 0
      %p90 = por %p88, %p89
      %p91 = scmp.ne.s32.totalorder %s83, %s85
      %p92 = scmp.eq.s32.totalorder %s19, 1
      %p93 = por %p91, %p92
      %p94 = scmp.ne.s32.totalorder %s85, %s86
      %p95 = scmp.eq.s32.totalorder %s19, 0
      %p96 = por %p94, %p95
      %p97 = scmp.ne.s32.totalorder %s85, %s86
      %p98 = scmp.eq.s32.totalorder %s20, 1
      %p99 = por %p97, %p98
      %p101 = scmp.ne.s32.totalorder %s86, %s100
      %p102 = scmp.eq.s32.totalorder %s20, 0
      %p103 = por %p101, %p102
      %s105 = sadd.s32 %s104, 1
      %p108 = scmp.eq.s32.totalorder %s14, 1
      %p109 = scmp.ne.s32.totalorder %s104, %s106
      %p110 = scmp.eq.s32.totalorder %s14, 0
      %p111 = por %p109, %p110
      %p112 = scmp.ne.s32.totalorder %s104, %s106
      %p113 = scmp.eq.s32.totalorder %s19, 1
      %p114 = por %p112, %p113
      %p115 = scmp.ne.s32.totalorder %s106, %s107
      %p116 = scmp.eq.s32.totalorder %s19, 0
      %p117 = por %p115, %p116
      %p118 = scmp.ne.s32.totalorder %s106, %s107
      %p119 = scmp.eq.s32.totalorder %s20, 1
      %p120 = por %p118, %p119
      %p122 = scmp.ne.s32.totalorder %s107, %s121
      %p123 = scmp.eq.s32.totalorder %s20, 0
      %p124 = por %p122, %p123
      %s126 = sadd.s32 %s125, 1
      %p129 = scmp.eq.s32.totalorder %s14, 1
      %p130 = scmp.ne.s32.totalorder %s125, %s127
      %p131 = scmp.eq.s32.totalorder %s14, 0
      %p132 = por %p130, %p131
      %p133 = scmp.ne.s32.totalorder %s125, %s127
      %p134 = scmp.eq.s32.totalorder %s19, 1
      %p135 = por %p133, %p134
      %p136 = scmp.ne.s32.totalorder %s127, %s128
      %p137 = scmp.eq.s32.totalorder %s19, 0
      %p138 = por %p136, %p137
      %p139 = scmp.ne.s32.totalorder %s127, %s128
      %p140 = scmp.eq.s32.totalorder %s20, 1
      %p141 = por %p139, %p140
      %p143 = scmp.ne.s32.totalorder %s128, %s142
      %p144 = scmp.eq.s32.totalorder %s20, 0
      %p145 = por %p143, %p144
      %s146 = ssub.s32 %s21, %s33
      %s147 = ssub.s32 %s22, %s29
      %s148 = sor.u32 %s146, %s147
      %p149 = scmp.eq.s32.totalorder %s148, 0
      %s151 = sadd.s32 %s150, 1
      %s152 = scalar_select %p149, %s150, %s151
      %p155 = pneg %p149
      %p156 = scmp.eq.s32.totalorder %s14, 1
      %p157 = por %p155, %p156
      %p158 = scmp.ne.s32.totalorder %s150, %s153
      %p159 = scmp.eq.s32.totalorder %s14, 0
      %p160 = por %p158, %p159
      %p161 = scmp.ne.s32.totalorder %s150, %s153
      %p162 = scmp.eq.s32.totalorder %s19, 1
      %p163 = por %p161, %p162
      %p164 = scmp.ne.s32.totalorder %s153, %s154
      %p165 = scmp.eq.s32.totalorder %s19, 0
      %p166 = por %p164, %p165
      %p167 = scmp.ne.s32.totalorder %s153, %s154
      %p168 = scmp.eq.s32.totalorder %s20, 1
      %p169 = por %p167, %p168
      %p171 = scmp.ne.s32.totalorder %s154, %s170
      %p172 = scmp.eq.s32.totalorder %s20, 0
      %p173 = por %p171, %p172
      %p174 = scmp.le.s32.totalorder 1, %s14
      %p175 = scmp.lt.s32.totalorder %s14, 3
      %p176 = pnand %p174, %p175
      %p177 = pneg %p176
      // Predicated region
      $region9: #{tpu_custom_call.1} parent=5 // pred_check
        _
      $region10: #{tpu_custom_call.1} parent=5 // pred_check_branch
        %179 = sbr.rel (%p176) target = $region12
      $region11: #{tpu_custom_call.1} parent=5 // pred_region
        %s180 = ssub.s32 %s14, 1
        // Predicated region
        $region13: #{tpu_custom_call.1} parent=11 // pred_check
          %p181 = pneg %p75
        $region14: #{tpu_custom_call.1} parent=11 // pred_check_branch
          %183 = sbr.rel (%p181) target = $region16
        $region15: #{tpu_custom_call.1} parent=11 // pred_region
          _
        $region16: #{tpu_custom_call.1} parent=11 // pred_fallthru
          _
        // Predicated region
        $region17: #{tpu_custom_call.1} parent=11 // pred_check
          %p184 = pneg %p96
        $region18: #{tpu_custom_call.1} parent=11 // pred_check_branch
          %186 = sbr.rel (%p184) target = $region20
        $region19: #{tpu_custom_call.1} parent=11 // pred_region
          _
        $region20: #{tpu_custom_call.1} parent=11 // pred_fallthru
          _
        // Predicated region
        $region21: #{tpu_custom_call.1} parent=11 // pred_check
          %p187 = pneg %p117
        $region22: #{tpu_custom_call.1} parent=11 // pred_check_branch
          %189 = sbr.rel (%p187) target = $region24
        $region23: #{tpu_custom_call.1} parent=11 // pred_region
          _
        $region24: #{tpu_custom_call.1} parent=11 // pred_fallthru
          _
        // Predicated region
        $region25: #{tpu_custom_call.1} parent=11 // pred_check
          %p190 = pneg %p138
        $region26: #{tpu_custom_call.1} parent=11 // pred_check_branch
          %192 = sbr.rel (%p190) target = $region28
        $region27: #{tpu_custom_call.1} parent=11 // pred_region
          _
        $region28: #{tpu_custom_call.1} parent=11 // pred_fallthru
          _
      $region12: #{tpu_custom_call.1} parent=5 // pred_fallthru
        _
      %p193 = scmp.lt.s32.totalorder %s14, 2
      // Predicated region
      $region29: #{tpu_custom_call.1} parent=5 // pred_check
        %p194 = pneg %p193
      $region30: #{tpu_custom_call.1} parent=5 // pred_check_branch
        %196 = sbr.rel (%p194) target = $region32
      $region31: #{tpu_custom_call.1} parent=5 // pred_region
        // Predicated region
        $region33: #{tpu_custom_call.1} parent=31 // pred_check
          %p197 = pneg %p48
        $region34: #{tpu_custom_call.1} parent=31 // pred_check_branch
          %199 = sbr.rel (%p197) target = $region36
        $region35: #{tpu_custom_call.1} parent=31 // pred_region
          %p200 = scmp.lt.s32.totalorder %s21, 1
          %s201 = scalar_select %p200, %s21, 1
          %p202 = scmp.lt.s32.totalorder %s22, 0
          %s203 = scalar_select %p202, %s22, 0
          %s204 = smul.addr %s201, 4
          %s205 = sadd.s32 %s203, %s204
          %s206 = smul.addr %s205, 8
          %s207 = scalar_lea.vmem %s0, %s206
        $region36: #{tpu_custom_call.1} parent=31 // pred_fallthru
          _
      $region32: #{tpu_custom_call.1} parent=5 // pred_fallthru
        _
      %p208 = scmp.le.s32.totalorder 1, %s14
      %p209 = scmp.lt.s32.totalorder %s14, 3
      %p210 = pnand %p208, %p209
      %p211 = pneg %p210
      // Predicated region
      $region37: #{tpu_custom_call.1} parent=5 // pred_check
        _
      $region38: #{tpu_custom_call.1} parent=5 // pred_check_branch
        %213 = sbr.rel (%p210) target = $region40
      $region39: #{tpu_custom_call.1} parent=5 // pred_region
        %s214 = ssub.s32 %s14, 1
        %p215 = scmp.lt.s32.totalorder %s23, 1
        %s216 = scalar_select %p215, %s23, 1
        %p217 = scmp.lt.s32.totalorder %s24, 0
        %s218 = scalar_select %p217, %s24, 0
        %s219 = smul.addr %s216, 4
        %s220 = sadd.s32 %s218, %s219
        %s221 = smul.addr %s220, 8
        %s222 = scalar_lea.vmem %s0, %s221
        %p223 = pneg %p54
        %p224 = pneg %p51
        %p225 = pneg %p75
        %p226 = pneg %p72
        %p227 = pneg %p96
        %p228 = pneg %p93
        %p229 = pneg %p117
        %p230 = pneg %p114
        %p231 = pneg %p138
        %p232 = pneg %p135
        %p233 = pneg %p166
        %p234 = pneg %p163
        %s235 = sand.u32 %s153, 1
        %s236 = scalar_lea.sflag [#allocation3], %s235
        %s237 = sand.u32 %s153, 1
        %s238 = smul.addr %s237, 4
        %s239 = scalar_lea.vmem [#allocation2], %s238
        %p240 = scmp.lt.s32.totalorder %s23, 1
        %s241 = scalar_select %p240, %s23, 1
        %p242 = scmp.lt.s32.totalorder %s24, 0
        %s243 = scalar_select %p242, %s24, 0
        %s244 = smul.addr %s241, 4
        %s245 = sadd.s32 %s243, %s244
        %s246 = smul.addr %s245, 8
        %s247 = scalar_lea.vmem %s0, %s246
        %v249 = vld [vmem:[%s1] sm:$0xf]
        %v250 = vld [vmem:[%s1 + $0x4] sm:$0xf]
        %v251 = vld [vmem:[%s1 + $0x8] sm:$0xf]
        %v252 = vld [vmem:[%s1 + $0xc] sm:$0xf]
        %v253 = vld [vmem:[%s1 + $0x10] sm:$0xf]
        %v254 = vld [vmem:[%s1 + $0x14] sm:$0xf]
        %v255 = vld [vmem:[%s1 + $0x18] sm:$0xf]
        %v256 = vld [vmem:[%s1 + $0x1c] sm:$0xf]
        %v257 = vld [vmem:[%s1 + $0x20] sm:$0xf]
        %v258 = vld [vmem:[%s1 + $0x24] sm:$0xf]
        %v259 = vld [vmem:[%s1 + $0x28] sm:$0xf]
        %v260 = vld [vmem:[%s1 + $0x2c] sm:$0xf]
        %v261 = vld [vmem:[%s1 + $0x30] sm:$0xf]
        %v262 = vld [vmem:[%s1 + $0x34] sm:$0xf]
        %v263 = vld [vmem:[%s1 + $0x38] sm:$0xf]
        %v264 = vld [vmem:[%s1 + $0x3c] sm:$0xf]
        %v265 = vld [vmem:[%s3] sm:$0x3]
        %v266 = vld [vmem:[%s2] sm:$0xff]
        %v267 = vld [vmem:[%s2 + $0x8] sm:$0xff]
        %v268 = vld [vmem:[%s2 + $0x10] sm:$0xff]
        %v269 = vld [vmem:[%s2 + $0x18] sm:$0xff]
        %v270 = vld [vmem:[%s2 + $0x20] sm:$0xff]
        %v271 = vld [vmem:[%s2 + $0x28] sm:$0xff]
        %v272 = vld [vmem:[%s2 + $0x30] sm:$0xff]
        %v273 = vld [vmem:[%s2 + $0x38] sm:$0xff]
        %v274 = vld [vmem:[%s2 + $0x40] sm:$0xff]
        %v275 = vld [vmem:[%s2 + $0x48] sm:$0xff]
        %v276 = vld [vmem:[%s2 + $0x50] sm:$0xff]
        %v277 = vld [vmem:[%s2 + $0x58] sm:$0xff]
        %v278 = vld [vmem:[%s2 + $0x60] sm:$0xff]
        %v279 = vld [vmem:[%s2 + $0x68] sm:$0xff]
        %v280 = vld [vmem:[%s2 + $0x70] sm:$0xff]
        %v281 = vld [vmem:[%s2 + $0x78] sm:$0xff]
        %v282 = vld [vmem:[%s4] sm:$0xf]
        %v283 = vld [vmem:[%s247] sm:$0xff]
        %v284 = vld [vmem:[%s247 + $0x8] sm:$0xff]
        %v285 = vpack.c.bf16 %v284, %v283
        %287 = vset.pattern.permute.xlu0 0
        %288 = vperm.xlu0 %287, %v266
        %v289 = vpop.permute.xlu0 %288
        %292 = vset.pattern.permute.xlu0 0
        %293 = vperm.xlu0 %292, %v267
        %v294 = vpop.permute.xlu0 %293
        %297 = vset.pattern.permute.xlu0 0
        %298 = vperm.xlu0 %297, %v268
        %v299 = vpop.permute.xlu0 %298
        %302 = vset.pattern.permute.xlu0 0
        %303 = vperm.xlu0 %302, %v269
        %v304 = vpop.permute.xlu0 %303
        %307 = vset.pattern.permute.xlu0 0
        %308 = vperm.xlu0 %307, %v270
        %v309 = vpop.permute.xlu0 %308
        %312 = vset.pattern.permute.xlu0 0
        %313 = vperm.xlu0 %312, %v271
        %v314 = vpop.permute.xlu0 %313
        %317 = vset.pattern.permute.xlu0 0
        %318 = vperm.xlu0 %317, %v272
        %v319 = vpop.permute.xlu0 %318
        %322 = vset.pattern.permute.xlu0 0
        %323 = vperm.xlu0 %322, %v273
        %v324 = vpop.permute.xlu0 %323
        %327 = vset.pattern.permute.xlu0 0
        %328 = vperm.xlu0 %327, %v274
        %v329 = vpop.permute.xlu0 %328
        %332 = vset.pattern.permute.xlu0 0
        %333 = vperm.xlu0 %332, %v275
        %v334 = vpop.permute.xlu0 %333
        %337 = vset.pattern.permute.xlu0 0
        %338 = vperm.xlu0 %337, %v276
        %v339 = vpop.permute.xlu0 %338
        %342 = vset.pattern.permute.xlu0 0
        %343 = vperm.xlu0 %342, %v277
        %v344 = vpop.permute.xlu0 %343
        %347 = vset.pattern.permute.xlu0 0
        %348 = vperm.xlu0 %347, %v278
        %v349 = vpop.permute.xlu0 %348
        %352 = vset.pattern.permute.xlu0 0
        %353 = vperm.xlu0 %352, %v279
        %v354 = vpop.permute.xlu0 %353
        %357 = vset.pattern.permute.xlu0 0
        %358 = vperm.xlu0 %357, %v280
        %v359 = vpop.permute.xlu0 %358
        %362 = vset.pattern.permute.xlu0 0
        %363 = vperm.xlu0 %362, %v281
        %v364 = vpop.permute.xlu0 %363
        %v382 = vunpack.c.l.b16 %v249
        %v383 = vunpack.c.l.b16 %v250
        %v384 = vunpack.c.l.b16 %v251
        %v385 = vunpack.c.l.b16 %v252
        %v386 = vunpack.c.l.b16 %v253
        %v387 = vunpack.c.l.b16 %v254
        %v388 = vunpack.c.l.b16 %v255
        %v389 = vunpack.c.l.b16 %v256
        %v390 = vunpack.c.l.b16 %v257
        %v391 = vunpack.c.l.b16 %v258
        %v392 = vunpack.c.l.b16 %v259
        %v393 = vunpack.c.l.b16 %v260
        %v394 = vunpack.c.l.b16 %v261
        %v395 = vunpack.c.l.b16 %v262
        %v396 = vunpack.c.l.b16 %v263
        %v397 = vunpack.c.l.b16 %v264
        %v398 = vpack.c.b16 %v383, %v382
        %v399 = vpack.c.b16 %v385, %v384
        %v400 = vpack.c.b16 %v387, %v386
        %v401 = vpack.c.b16 %v389, %v388
        %v402 = vpack.c.b16 %v391, %v390
        %v403 = vpack.c.b16 %v393, %v392
        %v404 = vpack.c.b16 %v395, %v394
        %v405 = vpack.c.b16 %v397, %v396
        %vm406 = vcmask 130048
        %v408 = vsel %vm406, %v398, 0
        %v411 = vsel %vm406, %v399, 0
        %v414 = vsel %vm406, %v400, 0
        %v417 = vsel %vm406, %v401, 0
        %v420 = vsel %vm406, %v402, 0
        %v423 = vsel %vm406, %v403, 0
        %v426 = vsel %vm406, %v404, 0
        %v429 = vsel %vm406, %v405, 0
        %431 = vmatpush.bf16.msra.mxu0 0
        %432 = vmatpush.bf16.msra.mxu0 0
        %433 = vmatpush.bf16.msra.mxu0 0
        %434 = vmatpush.bf16.msra.mxu0 0
        %435 = vmatpush.bf16.msra.mxu0 0
        %436 = vmatpush.bf16.msra.mxu0 0
        %437 = vmatpush.bf16.msra.mxu0 0
        %438 = vmatpush.bf16.msra.mxu0 %v285
        %439 = vmatmul.bf16.gmra.mxu0 %v408
        %v440 = vpop.f32.mrf.mxu0
        %v441 = vadd.f32 %v289, %v440
        %v442 = vpop.f32.mrf.mxu0
        %v443 = vadd.f32 %v294, %v442
        %444 = vmatmul.bf16.gmra.mxu0 %v411
        %v445 = vpop.f32.mrf.mxu0
        %v446 = vadd.f32 %v299, %v445
        %v447 = vpop.f32.mrf.mxu0
        %v448 = vadd.f32 %v304, %v447
        %449 = vmatmul.bf16.gmra.mxu0 %v414
        %v450 = vpop.f32.mrf.mxu0
        %v451 = vadd.f32 %v309, %v450
        %v452 = vpop.f32.mrf.mxu0
        %v453 = vadd.f32 %v314, %v452
        %454 = vmatmul.bf16.gmra.mxu0 %v417
        %v455 = vpop.f32.mrf.mxu0
        %v456 = vadd.f32 %v319, %v455
        %v457 = vpop.f32.mrf.mxu0
        %v458 = vadd.f32 %v324, %v457
        %459 = vmatmul.bf16.gmra.mxu0 %v420
        %v460 = vpop.f32.mrf.mxu0
        %v461 = vadd.f32 %v329, %v460
        %v462 = vpop.f32.mrf.mxu0
        %v463 = vadd.f32 %v334, %v462
        %464 = vmatmul.bf16.gmra.mxu0 %v423
        %v465 = vpop.f32.mrf.mxu0
        %v466 = vadd.f32 %v339, %v465
        %v467 = vpop.f32.mrf.mxu0
        %v468 = vadd.f32 %v344, %v467
        %469 = vmatmul.bf16.gmra.mxu0 %v426
        %v470 = vpop.f32.mrf.mxu0
        %v471 = vadd.f32 %v349, %v470
        %v472 = vpop.f32.mrf.mxu0
        %v473 = vadd.f32 %v354, %v472
        %474 = vmatmul.bf16.gmra.mxu0 %v429
        %v475 = vpop.f32.mrf.mxu0
        %v476 = vadd.f32 %v359, %v475
        %v477 = vpop.f32.mrf.mxu0
        %v478 = vadd.f32 %v364, %v477
        %479 = vdwg.mxu0
        %v480 = vpack.c.bf16 %v443, %v441
        %v481 = vpack.c.bf16 %v448, %v446
        %v482 = vpack.c.bf16 %v453, %v451
        %v483 = vpack.c.bf16 %v458, %v456
        %v484 = vpack.c.bf16 %v463, %v461
        %v485 = vpack.c.bf16 %v468, %v466
        %v486 = vpack.c.bf16 %v473, %v471
        %v487 = vpack.c.bf16 %v478, %v476
        %489 = vset.pattern.permute.xlu0 0
        %490 = vperm.xlu0 %489, %v282
        %v491 = vpop.permute.xlu0 %490
        %493 = vmatpush.bf16.msra.mxu0 %v487
        %494 = vmatpush.bf16.msra.mxu0 %v486
        %495 = vmatpush.bf16.msra.mxu0 %v485
        %496 = vmatpush.bf16.msra.mxu0 %v484
        %497 = vmatpush.bf16.msra.mxu0 %v483
        %498 = vmatpush.bf16.msra.mxu0 %v482
        %499 = vmatpush.bf16.msra.mxu0 %v481
        %500 = vmatpush.bf16.msra.mxu0 %v480
        %501 = vmatmul.bf16.gmra.mxu0 %v265
        %v502 = vpop.f32.mrf.mxu0
        %v503 = vadd.f32 %v491, %v502
        %v504 = vpop.f32.mrf.mxu0
        %505 = vdwg.mxu0
        %v506 = vadd.f32 %v503, %v283
        %s507 = scalar_lea.vmem %s247, 16
        %v508 = vld [vmem:[%s507] sm:$0xff]
        %v509 = vld [vmem:[%s507 + $0x8] sm:$0xff]
        %v510 = vpack.c.bf16 %v509, %v508
        %511 = vmatpush.bf16.msra.mxu0 0
        %512 = vmatpush.bf16.msra.mxu0 0
        %513 = vmatpush.bf16.msra.mxu0 0
        %514 = vmatpush.bf16.msra.mxu0 0
        %515 = vmatpush.bf16.msra.mxu0 0
        %516 = vmatpush.bf16.msra.mxu0 0
        %517 = vmatpush.bf16.msra.mxu0 0
        %518 = vmatpush.bf16.msra.mxu0 %v510
        %519 = vmatmul.bf16.gmra.mxu0 %v408
        %v520 = vpop.f32.mrf.mxu0
        %v521 = vadd.f32 %v289, %v520
        %v522 = vpop.f32.mrf.mxu0
        %v523 = vadd.f32 %v294, %v522
        %524 = vmatmul.bf16.gmra.mxu0 %v411
        %v525 = vpop.f32.mrf.mxu0
        %v526 = vadd.f32 %v299, %v525
        %v527 = vpop.f32.mrf.mxu0
        %v528 = vadd.f32 %v304, %v527
        %529 = vmatmul.bf16.gmra.mxu0 %v414
        %v530 = vpop.f32.mrf.mxu0
        %v531 = vadd.f32 %v309, %v530
        %v532 = vpop.f32.mrf.mxu0
        %v533 = vadd.f32 %v314, %v532
        %534 = vmatmul.bf16.gmra.mxu0 %v417
        %v535 = vpop.f32.mrf.mxu0
        %v536 = vadd.f32 %v319, %v535
        %v537 = vpop.f32.mrf.mxu0
        %v538 = vadd.f32 %v324, %v537
        %539 = vmatmul.bf16.gmra.mxu0 %v420
        %v540 = vpop.f32.mrf.mxu0
        %v541 = vadd.f32 %v329, %v540
        %v542 = vpop.f32.mrf.mxu0
        %v543 = vadd.f32 %v334, %v542
        %544 = vmatmul.bf16.gmra.mxu0 %v423
        %v545 = vpop.f32.mrf.mxu0
        %v546 = vadd.f32 %v339, %v545
        %v547 = vpop.f32.mrf.mxu0
        %v548 = vadd.f32 %v344, %v547
        %549 = vmatmul.bf16.gmra.mxu0 %v426
        %v550 = vpop.f32.mrf.mxu0
        %v551 = vadd.f32 %v349, %v550
        %v552 = vpop.f32.mrf.mxu0
        %v553 = vadd.f32 %v354, %v552
        %554 = vmatmul.bf16.gmra.mxu0 %v429
        %v555 = vpop.f32.mrf.mxu0
        %v556 = vadd.f32 %v359, %v555
        %v557 = vpop.f32.mrf.mxu0
        %v558 = vadd.f32 %v364, %v557
        %559 = vdwg.mxu0
        %v560 = vpack.c.bf16 %v523, %v521
        %v561 = vpack.c.bf16 %v528, %v526
        %v562 = vpack.c.bf16 %v533, %v531
        %v563 = vpack.c.bf16 %v538, %v536
        %v564 = vpack.c.bf16 %v543, %v541
        %v565 = vpack.c.bf16 %v548, %v546
        %v566 = vpack.c.bf16 %v553, %v551
        %v567 = vpack.c.bf16 %v558, %v556
        %568 = vmatpush.bf16.msra.mxu0 %v567
        %569 = vmatpush.bf16.msra.mxu0 %v566
        %570 = vmatpush.bf16.msra.mxu0 %v565
        %571 = vmatpush.bf16.msra.mxu0 %v564
        %572 = vmatpush.bf16.msra.mxu0 %v563
        %573 = vmatpush.bf16.msra.mxu0 %v562
        %574 = vmatpush.bf16.msra.mxu0 %v561
        %575 = vmatpush.bf16.msra.mxu0 %v560
        %576 = vmatmul.bf16.gmra.mxu0 %v265
        %v577 = vpop.f32.mrf.mxu0
        %v578 = vadd.f32 %v491, %v577
        %v579 = vpop.f32.mrf.mxu0
        %580 = vdwg.mxu0
        %v581 = vadd.f32 %v578, %v508
        %v582 = vmax.f32 %v506, %v581
        %v583 = vmax.f32 %v582, 0.0
        %vm584 = vcmask 60416
        %585 = vst.msk [vmem:[%s239] sm:$0xf] %vm584, %v583
        %s586 = sand.u32 %s153, 1
        %s587 = scalar_lea.sflag [#allocation3], %s586
        %s588 = sand.u32 %s153, 1
        %s589 = smul.addr %s588, 4
        %s590 = scalar_lea.vmem [#allocation2], %s589
        // Predicated region
        $region41: #{tpu_custom_call.1} parent=39 // pred_check
          %p591 = pneg %p163
        $region42: #{tpu_custom_call.1} parent=39 // pred_check_branch
          %593 = sbr.rel (%p591) target = $region44
        $region43: #{tpu_custom_call.1} parent=39 // pred_region
          %595 = vsyncadd %s587, 0
          %s596 = sadd.s32 %s24, %s23
          %s597 = smul.addr %s596, 4
          %s598 = scalar_lea.hbm %s5, %s597
          %s600 = sshll.u32 %s590, 4
          %s601 = int_to_ptr.vmem [resolvable:$true] %s600
          %s602 = sshll.u32 %s598, 4
          %s603 = int_to_ptr.hbm [resolvable:$true] %s602
          %605 = dma.vmem_to_hbm [thread:$0]  %s601, 64, %s603, %s587
        $region44: #{tpu_custom_call.1} parent=39 // pred_fallthru
          _
      $region40: #{tpu_custom_call.1} parent=5 // pred_fallthru
        _
      %p606 = scmp.le.s32.totalorder 2, %s14
      // Predicated region
      $region45: #{tpu_custom_call.1} parent=5 // pred_check
        %p607 = pneg %p606
      $region46: #{tpu_custom_call.1} parent=5 // pred_check_branch
        %609 = sbr.rel (%p607) target = $region48
      $region47: #{tpu_custom_call.1} parent=5 // pred_region
        %s610 = ssub.s32 %s14, 2
        // Predicated region
        $region49: #{tpu_custom_call.1} parent=47 // pred_check
          %p611 = pneg %p169
        $region50: #{tpu_custom_call.1} parent=47 // pred_check_branch
          %613 = sbr.rel (%p611) target = $region52
        $region51: #{tpu_custom_call.1} parent=47 // pred_region
          %s614 = sand.u32 %s154, 1
          %s615 = scalar_lea.sflag [#allocation3], %s614
          %s616 = sand.u32 %s154, 1
          %s617 = smul.addr %s616, 4
          %s618 = scalar_lea.vmem [#allocation2], %s617
          %620 = dma.done %s615, 64
        $region52: #{tpu_custom_call.1} parent=47 // pred_fallthru
          _
      $region48: #{tpu_custom_call.1} parent=5 // pred_fallthru
        _
    $region6: #{tpu_custom_call.1} parent=1 // loop_footer
      %s18 = sadd.s32 1, %s14
    $region7: #{tpu_custom_call.1} parent=1 // loop_footer_branch
      %13 = sbr.rel target = $region3
    $region8: #{tpu_custom_call.1} parent=1 // loop_exit
      _
    %621 = vsyncpa [#allocation3], 1
    %s622 = scalar_lea.sflag [#allocation3], 1
    %623 = vsyncpa %s622, 1

</llo_original>
